<compile_context>
chip_gen: v7x
topology: tpu7x:2x2x1
jax: 0.10.0
libtpu: 0.0.40
codegen_flags: <defaults>
</compile_context>

<pallas_src>
import math
import functools

import jax
import jax.numpy as jnp
from jax import lax
from jax.experimental import pallas as pl
from jax.experimental.pallas import tpu as pltpu


# ----------------------------------------------------------------------------
# Generation-aware sizing (VMEM limit + tile sizes)
# ----------------------------------------------------------------------------
def _detect_vmem_capacity():
    try:
        info = pltpu.get_tpu_info()
        cap = getattr(info, "vmem_capacity_bytes", None)
        if cap and int(cap) > 16 * 2**20:
            return int(cap)
    except Exception:
        pass
    return 64 * 1024 * 1024  # conservative (v7x-sized) fallback


_VMEM_CAP = _detect_vmem_capacity()
# Headroom below physical VMEM for compiler scratch / spills:
#   ~96 MiB on v5e/v6e (128 MiB physical), ~48 MiB on v7x (64 MiB physical).
_VMEM_LIMIT = max(32 * 2**20, min(_VMEM_CAP * 3 // 4, _VMEM_CAP - 8 * 2**20))
_BIG_VMEM = _VMEM_CAP >= 100 * 2**20

_PROJ_SEQ_TILE = 1024 if _BIG_VMEM else 512   # projection kernels
_ATTN_Q_TILE = 512 if _BIG_VMEM else 256      # attention query tile (smaller on v7x)
_ATTN_K_TILE = 1024 if _BIG_VMEM else 512     # attention key/value (flash) tile

_BIG = 1e30                      # |additive bias| for masked / padded keys
_MASKED_HEAD_THRESH = -_BIG / 10.0  # running max below this <=> whole key mask is False

# Grid-invariant operands (weights/biases) are single-buffered: their index_map is
# constant, so double-buffering only wastes VMEM.  Fallback if pl.Buffered /
# pipeline_mode is unavailable in this jax version.
_PIPE = {"use_buffered": hasattr(pl, "Buffered")}


def _invariant_spec(block_shape, index_map):
    if _PIPE["use_buffered"]:
        try:
            return pl.BlockSpec(block_shape, index_map, pipeline_mode=pl.Buffered(1))
        except TypeError:
            _PIPE["use_buffered"] = False
    return pl.BlockSpec(block_shape, index_map)


def _reciprocal(x):
    if hasattr(pl, "reciprocal"):
        return pl.reciprocal(x, approx=True)   # EUP path, nearly free
    return 1.0 / x


# ----------------------------------------------------------------------------
# Kernel 1: fused 1x1-Conv1d projections == per-position linear  y_i = x @ W_i + b_i
#   One HBM read of the activation serves up to three projections (QKV or KV).
#   Weights are pre-transposed to [Cin, Cout] on the host.
# ----------------------------------------------------------------------------
def _fused_proj_kernel(*refs, n_out, compute_dtype):
    x_ref = refs[0]
    x = x_ref[0].astype(compute_dtype)                          # [TN, Cin]
    for i in range(n_out):
        w_ref = refs[1 + 2 * i]
        b_ref = refs[2 + 2 * i]
        o_ref = refs[1 + 2 * n_out + i]
        y = jnp.dot(x, w_ref[...].astype(compute_dtype),
                    preferred_element_type=jnp.float32)          # f32 accumulate
        y = y + b_ref[...].astype(jnp.float32)
        o_ref[0] = y.astype(o_ref.dtype)


def fused_projections(x_bnc, projs, *, out_dtype, compute_dtype):
    """x: [B, N, Cin]; projs: [(w_t [Cin, Cout_i], b [Cout_i]), ...] -> tuple of [B, N, Cout_i]."""
    B, N, Cin = x_bnc.shape
    n_out = len(projs)
    tn = min(N, _PROJ_SEQ_TILE)

    in_specs = [pl.BlockSpec((1, tn, Cin), lambda bi, ni: (bi, ni, 0))]
    operands = [x_bnc]
    out_shapes, out_specs = [], []
    total_cout, w_bytes = 0, 0
    for w_t, b in projs:
        Cout = int(w_t.shape[1])
        total_cout += Cout
        w_bytes += int(w_t.size * jnp.dtype(w_t.dtype).itemsize)
        in_specs.append(_invariant_spec((Cin, Cout), lambda bi, ni: (0, 0)))
        in_specs.append(_invariant_spec((1, Cout), lambda bi, ni: (0, 0)))
        operands.append(w_t)
        operands.append(b.reshape(1, Cout).astype(jnp.float32))
        out_shapes.append(jax.ShapeDtypeStruct((B, N, Cout), out_dtype))
        out_specs.append(pl.BlockSpec((1, tn, Cout), lambda bi, ni: (bi, ni, 0)))

    flops = 2 * B * N * Cin * total_cout
    bytes_accessed = (int(x_bnc.size * jnp.dtype(x_bnc.dtype).itemsize) + w_bytes
                      + int(B * N * total_cout * jnp.dtype(out_dtype).itemsize))

    kern = functools.partial(_fused_proj_kernel, n_out=n_out, compute_dtype=compute_dtype)
    outs = pl.pallas_call(
        kern,
        out_shape=tuple(out_shapes),
        grid_spec=pltpu.PrefetchScalarGridSpec(
            num_scalar_prefetch=0,
            grid=(B, pl.cdiv(N, tn)),
            in_specs=in_specs,
            out_specs=tuple(out_specs)),
        compiler_params=pltpu.CompilerParams(
            dimension_semantics=("parallel", "parallel"),
            vmem_limit_bytes=_VMEM_LIMIT),
        cost_estimate=pl.CostEstimate(flops=flops, transcendentals=0,
                                      bytes_accessed=bytes_accessed),
    )(*operands)
    return tuple(outs) if isinstance(outs, (tuple, list)) else (outs,)


# ----------------------------------------------------------------------------
# Kernel 2: flash-style attention over all heads + fused output projection.
#   q: [B, NQ, H*dk] (1/sqrt(dk) already folded into the Q projection)
#   k: [B, NK, H*dk]   v: [B, NK, H*dv]
#   mask (optional): [B, H, NK] float {0,1} per-(batch,head) key mask, pre-gathered
#                    in the wrapper to reproduce the torch mask.repeat quirk.
#   out: [B, NQ, DV]  where out = softmax(QK^T + bias) V  head-combined, @ Wp + bp
# ----------------------------------------------------------------------------
def _flash_attn_kernel(*refs, num_heads, dk, dv, has_mask, nk_total):
    if has_mask:
        (q_ref, k_ref, v_ref, wp_ref, bp_ref, mask_ref,
         o_ref, m_ref, l_ref, acc_ref) = refs
    else:
        (q_ref, k_ref, v_ref, wp_ref, bp_ref,
         o_ref, m_ref, l_ref, acc_ref) = refs
        mask_ref = None

    ki = pl.program_id(2)
    tk = k_ref.shape[1]
    needs_pad = (nk_total % tk) != 0            # static python bool

    @pl.when(ki == 0)
    def _init():
        m_ref[...] = jnp.full_like(m_ref, -jnp.inf)
        l_ref[...] = jnp.zeros_like(l_ref)
        acc_ref[...] = jnp.zeros_like(acc_ref)

    q_all = q_ref[0]                            # [TQ, H*dk]
    k_all = k_ref[0]                            # [TK, H*dk]
    v_all = v_ref[0]                            # [TK, H*dv]

    pad_bias = None
    if needs_pad:
        # Last key tile extends past NK: zero the pad rows of K/V (stale VMEM could
        # hold inf/NaN) and bias their scores out of the softmax.
        kpos_col = ki * tk + lax.broadcasted_iota(jnp.int32, (tk, 1), 0)
        in_range = kpos_col < nk_total
        k_all = jnp.where(in_range, k_all, 0)
        v_all = jnp.where(in_range, v_all, 0)
        kpos_row = ki * tk + lax.broadcasted_iota(jnp.int32, (1, tk), 1)
        pad_bias = jnp.where(kpos_row < nk_total, 0.0, -_BIG)    # [1, TK] f32

    if has_mask:
        mask = mask_ref[0]                      # [H, TK] float {0,1}

    for h in range(num_heads):                  # static unroll over heads
        q_h = q_all[:, h * dk:(h + 1) * dk]     # [TQ, dk]
        k_h = k_all[:, h * dk:(h + 1) * dk]     # [TK, dk]
        v_h = v_all[:, h * dv:(h + 1) * dv]     # [TK, dv]

        # QK^T contracting the head dims directly (no materialized K transpose).
        s = lax.dot_general(q_h, k_h,
                            dimension_numbers=(((1,), (1,)), ((), ())),
                            preferred_element_type=jnp.float32)  # [TQ, TK]
        if needs_pad:
            s = s + pad_bias
        if has_mask:
            # Additive mask bias: 0 for valid keys, -1e30 for masked keys.
            s = s + (mask[h:h + 1, :] - 1.0) * _BIG

        m_prev = m_ref[:, h:h + 1]                               # [TQ, 1]
        m_cur = jnp.max(s, axis=-1, keepdims=True)
        m_new = jnp.maximum(m_prev, m_cur)
        alpha = jnp.exp(m_prev - m_new)
        p = jnp.exp(s - m_new)                                   # unnormalized probs

        l_ref[:, h:h + 1] = alpha * l_ref[:, h:h + 1] + jnp.sum(p, axis=-1, keepdims=True)
        acc_ref[:, h * dv:(h + 1) * dv] = (
            alpha * acc_ref[:, h * dv:(h + 1) * dv]
            + jnp.dot(p.astype(v_h.dtype), v_h, preferred_element_type=jnp.float32))
        m_ref[:, h:h + 1] = m_new

    # Last key tile: deferred softmax normalization + fused output projection,
    # accumulated head-by-head (no lane-dim concat of narrow head tiles).
    @pl.when(ki == pl.num_programs(2) - 1)
    def _epilogue():
        wp = wp_ref[...]                                         # [H*dv, DV]
        out = jnp.zeros((acc_ref.shape[0], wp.shape[1]), jnp.float32)
        for h in range(num_heads):
            inv_l = _reciprocal(l_ref[:, h:h + 1])               # [TQ, 1]
            y_h = acc_ref[:, h * dv:(h + 1) * dv] * inv_l        # [TQ, dv] f32
            if has_mask:
                # torch quirk: a head whose entire key mask is False outputs zeros.
                head_alive = m_ref[:, h:h + 1] > _MASKED_HEAD_THRESH
                y_h = jnp.where(head_alive, y_h, 0.0)
            out = out + jnp.dot(y_h.astype(wp.dtype), wp[h * dv:(h + 1) * dv, :],
                                preferred_element_type=jnp.float32)
        out = out + bp_ref[...].astype(jnp.float32)
        o_ref[0] = out.astype(o_ref.dtype)


def attention_with_out_proj(q, k, v, wp_t, bp, mask_ph, *, num_heads, out_dtype,
                            q_tile=None, k_tile=None):
    B, NQ, DK = q.shape
    NK = k.shape[1]
    DV = v.shape[2]
    dk = DK // num_heads
    dv = DV // num_heads
    tq = min(NQ, q_tile or _ATTN_Q_TILE)
    tk = min(NK, k_tile or _ATTN_K_TILE)
    nq_t = pl.cdiv(NQ, tq)
    nk_t = pl.cdiv(NK, tk)
    has_mask = mask_ph is not None

    kern = functools.partial(_flash_attn_kernel, num_heads=num_heads, dk=dk, dv=dv,
                             has_mask=has_mask, nk_total=NK)

    in_specs = [
        pl.BlockSpec((1, tq, DK), lambda b, qi, ki: (b, qi, 0)),
        pl.BlockSpec((1, tk, DK), lambda b, qi, ki: (b, ki, 0)),
        pl.BlockSpec((1, tk, DV), lambda b, qi, ki: (b, ki, 0)),
        _invariant_spec((DV, DV), lambda b, qi, ki: (0, 0)),
        _invariant_spec((1, DV), lambda b, qi, ki: (0, 0)),
    ]
    operands = [q, k, v, wp_t, bp.reshape(1, DV).astype(jnp.float32)]
    if has_mask:
        in_specs.append(pl.BlockSpec((1, num_heads, tk), lambda b, qi, ki: (b, 0, ki)))
        operands.append(mask_ph)

    itemsize = jnp.dtype(q.dtype).itemsize
    flops = 2 * B * num_heads * NQ * NK * (dk + dv) + 2 * B * NQ * DV * DV
    bytes_accessed = int(q.size * itemsize
                         + (k.size + v.size) * itemsize * nq_t       # K/V re-read per Q tile
                         + wp_t.size * jnp.dtype(wp_t.dtype).itemsize
                         + (mask_ph.size * 4 * nq_t if has_mask else 0)
                         + B * NQ * DV * jnp.dtype(out_dtype).itemsize)

    return pl.pallas_call(
        kern,
        out_shape=jax.ShapeDtypeStruct((B, NQ, DV), out_dtype),
        grid_spec=pltpu.PrefetchScalarGridSpec(
            num_scalar_prefetch=0,
            grid=(B, nq_t, nk_t),
            in_specs=in_specs,
            out_specs=pl.BlockSpec((1, tq, DV), lambda b, qi, ki: (b, qi, 0)),
            scratch_shapes=[pltpu.VMEM((tq, num_heads), jnp.float32),   # running max
                            pltpu.VMEM((tq, num_heads), jnp.float32),   # running row-sum
                            pltpu.VMEM((tq, DV), jnp.float32)]),        # head-packed acc
        compiler_params=pltpu.CompilerParams(
            dimension_semantics=("parallel", "parallel", "arbitrary"),
            vmem_limit_bytes=_VMEM_LIMIT),
        cost_estimate=pl.CostEstimate(flops=flops,
                                      transcendentals=B * num_heads * NQ * NK,
                                      bytes_accessed=bytes_accessed),
    )(*operands)


# ----------------------------------------------------------------------------
# Module wrapper (parameter setup + minimal layout plumbing in plain JAX)
# ----------------------------------------------------------------------------
class MultiHeadAttentionPallas:
    """MultiHeadAttention (use_conv1d_proj / requires_input_projection /
    use_separate_proj_weight / bias all True, dropout=0.0, eval).

    compute_dtype=bfloat16 is a valid fast path on every generation (v5e's MXU is
    bf16-native as well); accumulation and softmax statistics always stay f32."""

    def __init__(self, model_dim, num_heads, dim_key, dim_value, key,
                 compute_dtype=jnp.float32, attn_q_tile=None, attn_k_tile=None):
        dim_key = dim_key if dim_key else model_dim
        dim_value = dim_value if dim_value else model_dim
        self.num_heads = num_heads
        self.dim_k = dim_key // num_heads        # per-head key dim
        self.dim_v = dim_value // num_heads      # per-head value dim
        self.dim_key = dim_key
        self.dim_value = dim_value
        self.model_dim = model_dim
        self.compute_dtype = compute_dtype
        self.attn_q_tile = attn_q_tile
        self.attn_k_tile = attn_k_tile

        ks = jax.random.split(key, 8)

        def u(k, shape, fan_in):
            bound = 1.0 / math.sqrt(fan_in)
            return jax.random.uniform(k, shape, jnp.float32, -bound, bound)

        # Conv1d(kernel_size=1) weights in torch [out, in] layout (f32 master copy,
        # used by the pure-JAX reference).
        self.wq = u(ks[0], (dim_key, model_dim), model_dim)
        self.bq = u(ks[1], (dim_key,), model_dim)
        self.wk = u(ks[2], (dim_key, model_dim), model_dim)
        self.bk = u(ks[3], (dim_key,), model_dim)
        self.wv = u(ks[4], (dim_value, model_dim), model_dim)
        self.bv = u(ks[5], (dim_value,), model_dim)
        # out proj is a Conv1d in this config -> its bias is NOT zeroed
        # (torch only zeroes an nn.Linear out-proj bias).
        self.wp = u(ks[6], (dim_value, dim_value), dim_value)
        self.bp = u(ks[7], (dim_value,), dim_value)

        # Kernel-side parameters: pre-transposed to [Cin, Cout] (no in-kernel w.T),
        # 1/sqrt(dk) folded into the Q projection (exact in f32); weights optionally
        # pre-cast to the MXU compute dtype, biases kept f32.
        scale = 1.0 / math.sqrt(self.dim_k)
        wdt = compute_dtype
        self.wq_t = (self.wq * scale).T.astype(wdt)
        self.bq_s = (self.bq * scale).astype(jnp.float32)
        self.wk_t = self.wk.T.astype(wdt)
        self.wv_t = self.wv.T.astype(wdt)
        self.wp_t = self.wp.T.astype(wdt)
        self.bk_f = self.bk.astype(jnp.float32)
        self.bv_f = self.bv.astype(jnp.float32)
        self.bp_f = self.bp.astype(jnp.float32)
        # TODO(synk): optional fp8 (E4M3 + per-channel scale) weight path for v7x.

    def __call__(self, query, key=None, value=None, att_mask=None):
        # query/key/value: [B, model_dim, seq] (NCL); att_mask: [B, 1, n_kv] bool or None
        if key is None:
            key = query
        if value is None:
            value = query
        B = query.shape[0]
        out_dtype = query.dtype
        cdt = self.compute_dtype
        H = self.num_heads

        # NCL -> NLC once (1x1 conv on NCL == per-row linear on NLC); cast activations
        # to the compute dtype so the bf16 path halves HBM traffic.
        xq = jnp.transpose(query, (0, 2, 1)).astype(cdt)
        if key is query and value is query:
            # self-attention: fused QKV projection (one HBM read of the activation)
            q, k, v = fused_projections(
                xq,
                [(self.wq_t, self.bq_s), (self.wk_t, self.bk_f), (self.wv_t, self.bv_f)],
                out_dtype=cdt, compute_dtype=cdt)
        elif key is value:
            # cross-attention with shared key/value activation: fused K/V projection
            xk = jnp.transpose(key, (0, 2, 1)).astype(cdt)
            (q,) = fused_projections(xq, [(self.wq_t, self.bq_s)],
                                     out_dtype=cdt, compute_dtype=cdt)
            k, v = fused_projections(xk, [(self.wk_t, self.bk_f), (self.wv_t, self.bv_f)],
                                     out_dtype=cdt, compute_dtype=cdt)
        else:
            xk = jnp.transpose(key, (0, 2, 1)).astype(cdt)
            xv = jnp.transpose(value, (0, 2, 1)).astype(cdt)
            (q,) = fused_projections(xq, [(self.wq_t, self.bq_s)],
                                     out_dtype=cdt, compute_dtype=cdt)
            (k,) = fused_projections(xk, [(self.wk_t, self.bk_f)],
                                     out_dtype=cdt, compute_dtype=cdt)
            (v,) = fused_projections(xv, [(self.wv_t, self.bv_f)],
                                     out_dtype=cdt, compute_dtype=cdt)

        if att_mask is not None:
            # Reproduce PyTorch's mask.repeat(num_heads, 1, 1) indexing quirk:
            # flattened head row j = b*H + h reads original mask[(b*H + h) % B].
            idx = (jnp.arange(B)[:, None] * H + jnp.arange(H)[None, :]) % B   # [B, H]
            mask_ph = att_mask[idx, 0, :].astype(jnp.float32)                 # [B, H, NK]
        else:
            mask_ph = None

        out = attention_with_out_proj(q, k, v, self.wp_t, self.bp_f, mask_ph,
                                      num_heads=H, out_dtype=out_dtype,
                                      q_tile=self.attn_q_tile, k_tile=self.attn_k_tile)
        # TODO(synk): nn.Dropout(0.1) after the output projection is eval-mode identity.
        return jnp.transpose(out, (0, 2, 1))                                  # back to NCL


# ----------------------------------------------------------------------------
# Pure-JAX reference mirroring the PyTorch code (incl. the repeat() quirk)
# ----------------------------------------------------------------------------
def ref_forward(m: MultiHeadAttentionPallas, query, key=None, value=None, att_mask=None):
    if key is None:
        key = query
    if value is None:
        value = query
    B, _, NQ = query.shape
    H = m.num_heads

    def conv(x, w, b):
        return jnp.einsum('oc,bcn->bon', w, x) + b[None, :, None]

    q = jnp.transpose(conv(query, m.wq, m.bq), (0, 2, 1))
    k = jnp.transpose(conv(key, m.wk, m.bk), (0, 2, 1))
    v = jnp.transpose(conv(value, m.wv, m.bv), (0, 2, 1))

    def split(t):
        Bx, N, D = t.shape
        return t.reshape(Bx, N, H, D // H).transpose(0, 2, 1, 3).reshape(Bx * H, N, D // H)

    q, k, v = split(q), split(k), split(v)
    q = q / math.sqrt(k.shape[-1])
    att = jnp.einsum('bqd,bkd->bqk', q, k)
    out_scale = jnp.ones((q.shape[0], 1, 1), jnp.float32)
    if att_mask is not None:
        mrep = jnp.tile(att_mask, (1, NQ, 1))          # [B, NQ, NK]
        mrep = jnp.tile(mrep, (H, 1, 1))               # [B*H, NQ, NK] (torch.repeat order)
        att = jnp.where(mrep, att, -jnp.inf)
        allzero = jnp.sum(mrep, axis=(-2, -1)) == 0
        att = jnp.where(allzero[:, None, None], jnp.float32(1e-5), att)
        out_scale = jnp.where(allzero[:, None, None], 0.0, 1.0)
    att = jax.nn.softmax(att, axis=-1)
    y = jnp.einsum('bqk,bkd->bqd', att, v) * out_scale
    y = y.reshape(B, H, NQ, -1).transpose(0, 2, 1, 3).reshape(B, NQ, -1)
    out = jnp.einsum('oc,bnc->bno', m.wp, y) + m.bp[None, None, :]
    return jnp.transpose(out, (0, 2, 1))


# ----------------------------------------------------------------------------
# Smoke + correctness tests
# ----------------------------------------------------------------------------
def _run_checks():
    B, C, NQ, NK, H = 2, 32, 16, 16, 4

    root = jax.random.PRNGKey(0)
    kp, kq, kk, kv, km = jax.random.split(root, 5)

    mha = MultiHeadAttentionPallas(model_dim=C, num_heads=H, dim_key=C, dim_value=C, key=kp)

    query = jax.random.normal(kq, (B, C, NQ), jnp.float32)
    key_t = jax.random.normal(kk, (B, C, NK), jnp.float32)
    value = jax.random.normal(kv, (B, C, NK), jnp.float32)
    # boolean key mask [B, 1, NK]; batch 0 fully masked to exercise the all-masked path
    att_mask = jax.random.bernoulli(km, 0.7, (B, 1, NK))
    att_mask = att_mask.at[0].set(False)

    def check(name, out, ref, tol=5e-3):
        assert out.shape == ref.shape, (name, out.shape, ref.shape)
        err = float(jnp.max(jnp.abs(out - ref)))
        assert err <= tol, (name, err)

    # 1) cross-attention (key != value) with boolean key mask (separate projections)
    out = jax.block_until_ready(mha(query, key_t, value, att_mask))
    check("cross+mask", out, ref_forward(mha, query, key_t, value, att_mask))

    # 2) self-attention, no mask (fused QKV projection path)
    out = jax.block_until_ready(mha(query))
    check("self", out, ref_forward(mha, query))

    # 3) cross-attention with key is value (fused K/V projection path)
    out = jax.block_until_ready(mha(query, key_t, key_t, att_mask))
    check("cross kv-fused", out, ref_forward(mha, query, key_t, key_t, att_mask))

    # 4) multi-tile flash path: tiny q/k tiles so the online softmax spans key tiles
    mha_t = MultiHeadAttentionPallas(model_dim=C, num_heads=H, dim_key=C, dim_value=C,
                                     key=kp, attn_q_tile=8, attn_k_tile=8)
    out = jax.block_until_ready(mha_t(query, key_t, value))
    check("flash multi-tile", out, ref_forward(mha_t, query, key_t, value))

    # 5) bf16 MXU-input path (valid on v5e/v6e/v7x; accumulation stays f32): smoke test
    mha_bf16 = MultiHeadAttentionPallas(model_dim=C, num_heads=H, dim_key=C, dim_value=C,
                                        key=kp, compute_dtype=jnp.bfloat16)
    out_bf16 = jax.block_until_ready(mha_bf16(query, key_t, value, att_mask))
    assert out_bf16.shape == (B, C, NQ)
    assert bool(jnp.all(jnp.isfinite(out_bf16)))


if __name__ == "__main__":
    try:
        _run_checks()
    except Exception:
        # Defensive fallback: some jax versions reject pipeline_mode=pl.Buffered(1)
        # on grid-invariant operands.  Retry once with default double-buffering;
        # unrelated failures re-raise identically on the retry.
        if _PIPE["use_buffered"]:
            _PIPE["use_buffered"] = False
            _run_checks()
        else:
            raise
    print("KERNEL_OK")
</pallas_src>

<mosaic_0001>
module attributes {stable_mosaic.version = 11 : i64} {
  func.func @_fused_proj_kernel(%arg0: i32, %arg1: i32, %arg2: memref<1x16x32xf32, #tpu.memory_space<vmem>>, %arg3: memref<32x32xf32, #tpu.memory_space<vmem>>, %arg4: memref<1x32xf32, #tpu.memory_space<vmem>>, %arg5: memref<1x16x32xf32, #tpu.memory_space<vmem>>) attributes {dimension_semantics = [#tpu.dimension_semantics<parallel>, #tpu.dimension_semantics<parallel>], iteration_bounds = array<i64: 2, 1>, scalar_prefetch = 0 : i64, scratch_operands = 0 : i64, tpu.core_type = #tpu.core_type<tc>, window_params = [{transform_indices = @transform_0, window_bounds = array<i64: 1, 16, 32>}, {pipeline_mode = #tpu.pipeline_mode<synchronous>, transform_indices = @transform_1, window_bounds = array<i64: 32, 32>}, {pipeline_mode = #tpu.pipeline_mode<synchronous>, transform_indices = @transform_2, window_bounds = array<i64: 1, 32>}, {transform_indices = @transform_3, window_bounds = array<i64: 1, 16, 32>}]} {
    %c0 = arith.constant 0 : index
    %c0_0 = arith.constant 0 : index
    %c0_1 = arith.constant 0 : index
    %0 = vector.load %arg2[%c0, %c0_0, %c0_1] : memref<1x16x32xf32, #tpu.memory_space<vmem>>, vector<1x16x32xf32>
    %1 = vector.shape_cast %0 : vector<1x16x32xf32> to vector<16x32xf32>
    %c0_2 = arith.constant 0 : index
    %c0_3 = arith.constant 0 : index
    %2 = vector.load %arg3[%c0_2, %c0_3] : memref<32x32xf32, #tpu.memory_space<vmem>>, vector<32x32xf32>
    %cst = arith.constant dense<0.000000e+00> : vector<16x32xf32>
    %3 = tpu.matmul %1, %2, %cst {dimension_numbers = #tpu.dot_dimension_numbers<[1], [0], [0], [1], [0, 0, 1, 1], [], []>} : vector<16x32xf32>, vector<32x32xf32>, vector<16x32xf32> -> vector<16x32xf32>
    %c0_4 = arith.constant 0 : index
    %c0_5 = arith.constant 0 : index
    %4 = vector.load %arg4[%c0_4, %c0_5] : memref<1x32xf32, #tpu.memory_space<vmem>>, vector<1x32xf32>
    %5 = vector.broadcast %4 : vector<1x32xf32> to vector<16x32xf32>
    %6 = arith.addf %3, %5 : vector<16x32xf32>
    %c0_6 = arith.constant 0 : index
    %c0_7 = arith.constant 0 : index
    %c0_8 = arith.constant 0 : index
    %7 = vector.load %arg5[%c0_6, %c0_7, %c0_8] : memref<1x16x32xf32, #tpu.memory_space<vmem>>, vector<1x16x32xf32>
    %8 = vector.shape_cast %7 : vector<1x16x32xf32> to vector<16x32xf32>
    %9 = vector.shape_cast %6 : vector<16x32xf32> to vector<1x16x32xf32>
    tpu.vector_store %arg5[%c0_6, %c0_7, %c0_8], %9 {strides = array<i32>} : memref<1x16x32xf32, #tpu.memory_space<vmem>>, vector<1x16x32xf32>,
    return
  }
  func.func @transform_0(%arg0: i32, %arg1: i32) -> (i32, i32, i32) {
    %c0_i32 = arith.constant 0 : i32
    %c0_i32_0 = arith.constant 0 : i32
    return %arg0, %arg1, %c0_i32 : i32, i32, i32
  }
  func.func @transform_1(%arg0: i32, %arg1: i32) -> (i32, i32) {
    %c0_i32 = arith.constant 0 : i32
    %c0_i32_0 = arith.constant 0 : i32
    %c0_i32_1 = arith.constant 0 : i32
    return %c0_i32, %c0_i32_0 : i32, i32
  }
  func.func @transform_2(%arg0: i32, %arg1: i32) -> (i32, i32) {
    %c0_i32 = arith.constant 0 : i32
    %c0_i32_0 = arith.constant 0 : i32
    %c0_i32_1 = arith.constant 0 : i32
    return %c0_i32, %c0_i32_0 : i32, i32
  }
  func.func @transform_3(%arg0: i32, %arg1: i32) -> (i32, i32, i32) {
    %c0_i32 = arith.constant 0 : i32
    %c0_i32_0 = arith.constant 0 : i32
    return %arg0, %arg1, %c0_i32 : i32, i32, i32
  }
}

module attributes {stable_mosaic.version = 11 : i64} {
  func.func @_fused_proj_kernel(%arg0: i32, %arg1: i32, %arg2: memref<1x16x32xf32, #tpu.memory_space<vmem>>, %arg3: memref<32x32xf32, #tpu.memory_space<vmem>>, %arg4: memref<1x32xf32, #tpu.memory_space<vmem>>, %arg5: memref<1x16x32xf32, #tpu.memory_space<vmem>>) attributes {dimension_semantics = [#tpu.dimension_semantics<parallel>, #tpu.dimension_semantics<parallel>], iteration_bounds = array<i64: 2, 1>, scalar_prefetch = 0 : i64, scratch_operands = 0 : i64, tpu.core_type = #tpu.core_type<tc>, window_params = [{transform_indices = @transform_0, window_bounds = array<i64: 1, 16, 32>}, {pipeline_mode = #tpu.pipeline_mode<synchronous>, transform_indices = @transform_1, window_bounds = array<i64: 32, 32>}, {pipeline_mode = #tpu.pipeline_mode<synchronous>, transform_indices = @transform_2, window_bounds = array<i64: 1, 32>}, {transform_indices = @transform_3, window_bounds = array<i64: 1, 16, 32>}]} {
    %c0 = arith.constant 0 : index
    %c0_0 = arith.constant 0 : index
    %c0_1 = arith.constant 0 : index
    %0 = vector.load %arg2[%c0, %c0_0, %c0_1] : memref<1x16x32xf32, #tpu.memory_space<vmem>>, vector<1x16x32xf32>
    %1 = vector.shape_cast %0 : vector<1x16x32xf32> to vector<16x32xf32>
    %c0_2 = arith.constant 0 : index
    %c0_3 = arith.constant 0 : index
    %2 = vector.load %arg3[%c0_2, %c0_3] : memref<32x32xf32, #tpu.memory_space<vmem>>, vector<32x32xf32>
    %cst = arith.constant dense<0.000000e+00> : vector<16x32xf32>
    %3 = tpu.matmul %1, %2, %cst {dimension_numbers = #tpu.dot_dimension_numbers<[1], [0], [0], [1], [0, 0, 1, 1], [], []>} : vector<16x32xf32>, vector<32x32xf32>, vector<16x32xf32> -> vector<16x32xf32>
    %c0_4 = arith.constant 0 : index
    %c0_5 = arith.constant 0 : index
    %4 = vector.load %arg4[%c0_4, %c0_5] : memref<1x32xf32, #tpu.memory_space<vmem>>, vector<1x32xf32>
    %5 = vector.broadcast %4 : vector<1x32xf32> to vector<16x32xf32>
    %6 = arith.addf %3, %5 : vector<16x32xf32>
    %c0_6 = arith.constant 0 : index
    %c0_7 = arith.constant 0 : index
    %c0_8 = arith.constant 0 : index
    %7 = vector.load %arg5[%c0_6, %c0_7, %c0_8] : memref<1x16x32xf32, #tpu.memory_space<vmem>>, vector<1x16x32xf32>
    %8 = vector.shape_cast %7 : vector<1x16x32xf32> to vector<16x32xf32>
    %9 = vector.shape_cast %6 : vector<16x32xf32> to vector<1x16x32xf32>
    tpu.vector_store %arg5[%c0_6, %c0_7, %c0_8], %9 {strides = array<i32>} : memref<1x16x32xf32, #tpu.memory_space<vmem>>, vector<1x16x32xf32>,
    return
  }
  func.func @transform_0(%arg0: i32, %arg1: i32) -> (i32, i32, i32) {
    %c0_i32 = arith.constant 0 : i32
    %c0_i32_0 = arith.constant 0 : i32
    return %arg0, %arg1, %c0_i32 : i32, i32, i32
  }
  func.func @transform_1(%arg0: i32, %arg1: i32) -> (i32, i32) {
    %c0_i32 = arith.constant 0 : i32
    %c0_i32_0 = arith.constant 0 : i32
    %c0_i32_1 = arith.constant 0 : i32
    return %c0_i32, %c0_i32_0 : i32, i32
  }
  func.func @transform_2(%arg0: i32, %arg1: i32) -> (i32, i32) {
    %c0_i32 = arith.constant 0 : i32
    %c0_i32_0 = arith.constant 0 : i32
    %c0_i32_1 = arith.constant 0 : i32
    return %c0_i32, %c0_i32_0 : i32, i32
  }
  func.func @transform_3(%arg0: i32, %arg1: i32) -> (i32, i32, i32) {
    %c0_i32 = arith.constant 0 : i32
    %c0_i32_0 = arith.constant 0 : i32
    return %arg0, %arg1, %c0_i32 : i32, i32, i32
  }
}

</mosaic_0001>

<llo_original>
// kernel: tpu_custom_call.1
$region0: #{tpu_custom_call.1}
  #allocation0 [shape = 'u32[]', space=smem, size = 0x4, offset = 0x4, fixed_abs, tag = 'smem constant byte address 0x4 - core index']
  #allocation1 [shape = 'u32[144,128]{1,0:T(1,128)}', space=vmem, size = 0x12000, scoped, tag = 'internal scratch']
  %s0 = inlined_call_operand.hbm [shape: f32[2,16,32], index: 0, kind: input, shape index: {}]
  %s1 = inlined_call_operand.hbm [shape: f32[32,32], index: 1, kind: input, shape index: {}]
  %s2 = inlined_call_operand.vmem [shape: f32[1,32], index: 2, kind: input, shape index: {}]
  %s3 = inlined_call_operand.hbm [shape: f32[2,16,32], index: 3, kind: output, shape index: {}]
  %s4 = sld [smem:[#allocation0]]
  $region53: #{tpu_custom_call.1} parent=0
    _
  %s6 = ssub.s32 1, %s4
  %s7 = scalar_select 0, %s6, %s4
  $region1: #{tpu_custom_call.1} parent=0
    #allocation2 [shape = 'u8[16384]{0}', space=vmem, size = 0x4000, scoped, tag = 'input window, operand 0']
    #allocation3 [shape = 's32[2]{0}', space=sflag, size = 0x8, scoped, tag = 'scoped memory for tpu_custom_call.1']
    #allocation4 [shape = 's32[2]{0}', space=sflag, size = 0x8, scoped, tag = 'scoped memory for tpu_custom_call.1']
    #allocation5 [shape = 'u8[16384]{0}', space=vmem, size = 0x4000, scoped, tag = 'input window, operand 1, single buffered']
    #allocation6 [shape = 's32[1]{0}', space=sflag, size = 0x4, scoped, tag = 'scoped memory for tpu_custom_call.1']
    #allocation7 [shape = 'u8[16384]{0}', space=vmem, size = 0x4000, scoped, tag = 'output window, operand 0']
    %8 = vsyncpa [#allocation3], 0
    %s9 = scalar_lea.sflag [#allocation3], 1
    %10 = vsyncpa %s9, 0
    %11 = vsyncpa [#allocation6], 0
    %12 = vsyncpa [#allocation4], 0
    %s13 = scalar_lea.sflag [#allocation4], 1
    %14 = vsyncpa %s13, 0
    loop: start=0, step=1, limit=4
    $region2: #{tpu_custom_call.1} parent=1 // loop_pre_header
      _
    $region3: #{tpu_custom_call.1} parent=1 // loop_header
      %s16 = sphi 0, %s20
      %p17 = scmp.ge.s32.totalorder %s16, 4
      %s23 = sphi 0, %s35
      %s24 = sphi 0, %s31
      %s25 = sphi 0, %s23
      %s26 = sphi 0, %s24
      %s27 = sphi 0, %s25
      %s28 = sphi 0, %s26
      %s40 = sphi 0, %s42
      %s43 = sphi 0, %s40
      %s44 = sphi 0, %s43
      %s60 = sphi 0, %s44
      %s64 = sphi 0, %s64
      %s66 = sphi 0, %s64
      %s67 = sphi 0, %s66
      %s81 = sphi 0, %s67
      %s85 = sphi 0, %s85
      %s87 = sphi 0, %s85
      %s88 = sphi 0, %s87
      %s102 = sphi 0, %s88
      %s110 = sphi 0, %s112
      %s113 = sphi 0, %s110
      %s114 = sphi 0, %s113
      %s130 = sphi 0, %s114
    $region4: #{tpu_custom_call.1} parent=1 // loop_header_branch
      %19 = sbr.rel (%p17) target = $region8
    $region5: #{tpu_custom_call.1} parent=1 // loop_body
      %s21 = ssub.s32 %s16, 1
      %s22 = ssub.s32 %s16, 2
      %s29 = sadd.s32 1, %s24
      %p30 = scmp.ge.s32.totalorder %s29, 1
      %s31 = scalar_select %p30, 0, %s29
      %s32 = sadd.s32 1, %s23
      %s33 = scalar_select %p30, %s32, %s23
      %p34 = scmp.ge.s32.totalorder %s33, 2
      %s35 = scalar_select %p34, 0, %s33
      %s36 = ssub.s32 %s23, %s35
      %s37 = ssub.s32 %s24, %s31
      %s38 = sor.u32 %s36, %s37
      %p39 = scmp.eq.s32.totalorder %s38, 0
      %s41 = sadd.s32 %s40, 1
      %s42 = scalar_select %p39, %s40, %s41
      %p45 = pneg %p39
      %p46 = scmp.eq.s32.totalorder %s16, 1
      %p47 = por %p45, %p46
      %p48 = scmp.ne.s32.totalorder %s40, %s43
      %p49 = scmp.eq.s32.totalorder %s16, 0
      %p50 = por %p48, %p49
      %p51 = scmp.ne.s32.totalorder %s40, %s43
      %p52 = scmp.eq.s32.totalorder %s21, 1
      %p53 = por %p51, %p52
      %p54 = scmp.ne.s32.totalorder %s43, %s44
      %p55 = scmp.eq.s32.totalorder %s21, 0
      %p56 = por %p54, %p55
      %p57 = scmp.ne.s32.totalorder %s43, %s44
      %p58 = scmp.eq.s32.totalorder %s22, 1
      %p59 = por %p57, %p58
      %p61 = scmp.ne.s32.totalorder %s44, %s60
      %p62 = scmp.eq.s32.totalorder %s22, 0
      %p63 = por %p61, %p62
      %s65 = sadd.s32 %s64, 1
      %p68 = scmp.eq.s32.totalorder %s16, 1
      %p69 = scmp.ne.s32.totalorder %s64, %s66
      %p70 = scmp.eq.s32.totalorder %s16, 0
      %p71 = por %p69, %p70
      %p72 = scmp.ne.s32.totalorder %s64, %s66
      %p73 = scmp.eq.s32.totalorder %s21, 1
      %p74 = por %p72, %p73
      %p75 = scmp.ne.s32.totalorder %s66, %s67
      %p76 = scmp.eq.s32.totalorder %s21, 0
      %p77 = por %p75, %p76
      %p78 = scmp.ne.s32.totalorder %s66, %s67
      %p79 = scmp.eq.s32.totalorder %s22, 1
      %p80 = por %p78, %p79
      %p82 = scmp.ne.s32.totalorder %s67, %s81
      %p83 = scmp.eq.s32.totalorder %s22, 0
      %p84 = por %p82, %p83
      %s86 = sadd.s32 %s85, 1
      %p89 = scmp.eq.s32.totalorder %s16, 1
      %p90 = scmp.ne.s32.totalorder %s85, %s87
      %p91 = scmp.eq.s32.totalorder %s16, 0
      %p92 = por %p90, %p91
      %p93 = scmp.ne.s32.totalorder %s85, %s87
      %p94 = scmp.eq.s32.totalorder %s21, 1
      %p95 = por %p93, %p94
      %p96 = scmp.ne.s32.totalorder %s87, %s88
      %p97 = scmp.eq.s32.totalorder %s21, 0
      %p98 = por %p96, %p97
      %p99 = scmp.ne.s32.totalorder %s87, %s88
      %p100 = scmp.eq.s32.totalorder %s22, 1
      %p101 = por %p99, %p100
      %p103 = scmp.ne.s32.totalorder %s88, %s102
      %p104 = scmp.eq.s32.totalorder %s22, 0
      %p105 = por %p103, %p104
      %s106 = ssub.s32 %s23, %s35
      %s107 = ssub.s32 %s24, %s31
      %s108 = sor.u32 %s106, %s107
      %p109 = scmp.eq.s32.totalorder %s108, 0
      %s111 = sadd.s32 %s110, 1
      %s112 = scalar_select %p109, %s110, %s111
      %p115 = pneg %p109
      %p116 = scmp.eq.s32.totalorder %s16, 1
      %p117 = por %p115, %p116
      %p118 = scmp.ne.s32.totalorder %s110, %s113
      %p119 = scmp.eq.s32.totalorder %s16, 0
      %p120 = por %p118, %p119
      %p121 = scmp.ne.s32.totalorder %s110, %s113
      %p122 = scmp.eq.s32.totalorder %s21, 1
      %p123 = por %p121, %p122
      %p124 = scmp.ne.s32.totalorder %s113, %s114
      %p125 = scmp.eq.s32.totalorder %s21, 0
      %p126 = por %p124, %p125
      %p127 = scmp.ne.s32.totalorder %s113, %s114
      %p128 = scmp.eq.s32.totalorder %s22, 1
      %p129 = por %p127, %p128
      %p131 = scmp.ne.s32.totalorder %s114, %s130
      %p132 = scmp.eq.s32.totalorder %s22, 0
      %p133 = por %p131, %p132
      %p134 = scmp.le.s32.totalorder 1, %s16
      %p135 = scmp.lt.s32.totalorder %s16, 3
      %p136 = pnand %p134, %p135
      %p137 = pneg %p136
      // Predicated region
      $region9: #{tpu_custom_call.1} parent=5 // pred_check
        _
      $region10: #{tpu_custom_call.1} parent=5 // pred_check_branch
        %139 = sbr.rel (%p136) target = $region12
      $region11: #{tpu_custom_call.1} parent=5 // pred_region
        %s140 = ssub.s32 %s16, 1
        // Predicated region
        $region13: #{tpu_custom_call.1} parent=11 // pred_check
          %p141 = pneg %p77
        $region14: #{tpu_custom_call.1} parent=11 // pred_check_branch
          %143 = sbr.rel (%p141) target = $region16
        $region15: #{tpu_custom_call.1} parent=11 // pred_region
          %s145 = ssub.s32 512, 512
          %146 = vsyncadd [#allocation6], %s145
          %s147 = sshll.u32 [#allocation5], 4
          %s148 = int_to_ptr.vmem [resolvable:$true] %s147
          %153 = dma.hbm_to_vmem [thread:$0]  %s1, 512, %s148, [#allocation6], 128, 128, 8
        $region16: #{tpu_custom_call.1} parent=11 // pred_fallthru
          _
        // Predicated region
        $region17: #{tpu_custom_call.1} parent=11 // pred_check
          %p154 = pneg %p98
        $region18: #{tpu_custom_call.1} parent=11 // pred_check_branch
          %156 = sbr.rel (%p154) target = $region20
        $region19: #{tpu_custom_call.1} parent=11 // pred_region
          _
        $region20: #{tpu_custom_call.1} parent=11 // pred_fallthru
          _
      $region12: #{tpu_custom_call.1} parent=5 // pred_fallthru
        _
      %p157 = scmp.lt.s32.totalorder %s16, 2
      // Predicated region
      $region21: #{tpu_custom_call.1} parent=5 // pred_check
        %p158 = pneg %p157
      $region22: #{tpu_custom_call.1} parent=5 // pred_check_branch
        %160 = sbr.rel (%p158) target = $region24
      $region23: #{tpu_custom_call.1} parent=5 // pred_region
        // Predicated region
        $region25: #{tpu_custom_call.1} parent=23 // pred_check
          %p161 = pneg %p50
        $region26: #{tpu_custom_call.1} parent=23 // pred_check_branch
          %163 = sbr.rel (%p161) target = $region28
        $region27: #{tpu_custom_call.1} parent=23 // pred_region
          %s164 = sand.u32 %s40, 1
          %s165 = scalar_lea.sflag [#allocation3], %s164
          %s166 = sand.u32 %s40, 1
          %s167 = smul.addr %s166, 16
          %s168 = scalar_lea.vmem [#allocation2], %s167
          %s169 = smul.u32 2, %s24
          %s171 = ssub.s32 256, 256
          %172 = vsyncadd %s165, %s171
          %s173 = smul.addr %s23, 2
          %s174 = sadd.s32 %s169, %s173
          %s175 = smul.addr %s174, 128
          %s176 = scalar_lea.hbm %s0, %s175
          %s177 = sshll.u32 %s168, 4
          %s178 = int_to_ptr.vmem [resolvable:$true] %s177
          %183 = dma.hbm_to_vmem [thread:$0]  %s176, 256, %s178, %s165, 128, 128, 8
        $region28: #{tpu_custom_call.1} parent=23 // pred_fallthru
          _
      $region24: #{tpu_custom_call.1} parent=5 // pred_fallthru
        _
      %p184 = scmp.le.s32.totalorder 1, %s16
      %p185 = scmp.lt.s32.totalorder %s16, 3
      %p186 = pnand %p184, %p185
      %p187 = pneg %p186
      // Predicated region
      $region29: #{tpu_custom_call.1} parent=5 // pred_check
        _
      $region30: #{tpu_custom_call.1} parent=5 // pred_check_branch
        %189 = sbr.rel (%p186) target = $region32
      $region31: #{tpu_custom_call.1} parent=5 // pred_region
        %s190 = ssub.s32 %s16, 1
        %s191 = sand.u32 %s43, 1
        %s192 = scalar_lea.sflag [#allocation3], %s191
        %s193 = sand.u32 %s43, 1
        %s194 = smul.addr %s193, 16
        %s195 = scalar_lea.vmem [#allocation2], %s194
        // Predicated region
        $region33: #{tpu_custom_call.1} parent=31 // pred_check
          %p196 = pneg %p56
        $region34: #{tpu_custom_call.1} parent=31 // pred_check_branch
          %198 = sbr.rel (%p196) target = $region36
        $region35: #{tpu_custom_call.1} parent=31 // pred_region
          %199 = dma.done %s192, 256
        $region36: #{tpu_custom_call.1} parent=31 // pred_fallthru
          _
        // Predicated region
        $region37: #{tpu_custom_call.1} parent=31 // pred_check
          %p200 = pneg %p77
        $region38: #{tpu_custom_call.1} parent=31 // pred_check_branch
          %202 = sbr.rel (%p200) target = $region40
        $region39: #{tpu_custom_call.1} parent=31 // pred_region
          %203 = dma.done [#allocation6], 512
        $region40: #{tpu_custom_call.1} parent=31 // pred_fallthru
          _
        %s204 = sand.u32 %s43, 1
        %s205 = scalar_lea.sflag [#allocation3], %s204
        %s206 = sand.u32 %s43, 1
        %s207 = smul.addr %s206, 16
        %s208 = scalar_lea.vmem [#allocation2], %s207
        %p209 = pneg %p56
        %p210 = pneg %p53
        %p211 = pneg %p77
        %p212 = pneg %p74
        %p213 = pneg %p98
        %p214 = pneg %p95
        %p215 = pneg %p126
        %p216 = pneg %p123
        %s217 = sand.u32 %s113, 1
        %s218 = scalar_lea.sflag [#allocation4], %s217
        %s219 = sand.u32 %s113, 1
        %s220 = smul.addr %s219, 16
        %s221 = scalar_lea.vmem [#allocation7], %s220
        %s222 = smul.u32 2, %s26
        %s223 = smul.u32 2, %s26
        %v224 = vld [vmem:[%s195] sm:$0xff]
        %v225 = vld [vmem:[%s195 + $0x8] sm:$0xff]
        %v226 = vld [vmem:[#allocation5] sm:$0xff]
        %v227 = vld [vmem:[#allocation5 + $0x8] sm:$0xff]
        %v228 = vld [vmem:[#allocation5 + $0x10] sm:$0xff]
        %v229 = vld [vmem:[#allocation5 + $0x18] sm:$0xff]
        %v230 = vld [vmem:[%s2] sm:$0x1]
        %v232 = vlaneseq
        %v233 = vshrl.u32 %v232, 7
        %v234 = vsub.s32 0, %v233
        %v235 = vrot.slane %v230, %v234
        %vm237 = vcmask 261120
        %v239 = vsel %vm237, %v224, 0
        %v242 = vsel %vm237, %v225, 0
        %244 = vmatprep.subr.mxu0 0.0
        %245 = vmatpush1.msra.mxu0 %v226
        %246 = vmatprep.subr.mxu0 0.0
        %247 = vmatpush1.msra.mxu0 %v227
        %248 = vmatprep.subr.mxu0 0.0
        %249 = vmatpush1.msra.mxu0 %v228
        %250 = vmatprep.subr.mxu0 0.0
        %251 = vmatpush1.msra.mxu0 %v229
        %252 = vmatprep.subr.mxu0 0.0
        %253 = vmatpush1.msra.mxu0 0.0
        %254 = vmatprep.subr.mxu0 0.0
        %255 = vmatpush1.msra.mxu0 0.0
        %256 = vmatprep.subr.mxu0 0.0
        %257 = vmatpush1.msra.mxu0 0.0
        %258 = vmatprep.subr.mxu0 0.0
        %259 = vmatpush1.msra.mxu0 0.0
        %260 = vmatprep.subr.mxu0 0.0
        %261 = vmatpush1.msra.mxu0 0.0
        %262 = vmatprep.subr.mxu0 0.0
        %263 = vmatpush1.msra.mxu0 0.0
        %264 = vmatprep.subr.mxu0 0.0
        %265 = vmatpush1.msra.mxu0 0.0
        %266 = vmatprep.subr.mxu0 0.0
        %267 = vmatpush1.msra.mxu0 0.0
        %268 = vmatprep.subr.mxu0 0.0
        %269 = vmatpush1.msra.mxu0 0.0
        %270 = vmatprep.subr.mxu0 0.0
        %271 = vmatpush1.msra.mxu0 0.0
        %272 = vmatprep.subr.mxu0 0.0
        %273 = vmatpush1.msra.mxu0 0.0
        %274 = vmatprep.subr.mxu0 0.0
        %275 = vmatpush1.msra.mxu0 0.0
        %276 = vmatprep.subr.mxu0 0.0
        %277 = vmatpush1.msra.mxu0 0.0
        %278 = vmatprep.subr.mxu0 0.0
        %279 = vmatpush1.msra.mxu0 0.0
        %280 = vmatprep.subr.mxu0 0.0
        %281 = vmatpush1.msra.mxu0 0.0
        %282 = vmatprep.subr.mxu0 0.0
        %283 = vmatpush1.msra.mxu0 0.0
        %284 = vmatprep.subr.mxu0 0.0
        %285 = vmatpush1.msra.mxu0 0.0
        %286 = vmatprep.subr.mxu0 0.0
        %287 = vmatpush1.msra.mxu0 0.0
        %288 = vmatprep.subr.mxu0 0.0
        %289 = vmatpush1.msra.mxu0 0.0
        %290 = vmatprep.subr.mxu0 0.0
        %291 = vmatpush1.msra.mxu0 0.0
        %292 = vmatprep.subr.mxu0 0.0
        %293 = vmatpush1.msra.mxu0 0.0
        %294 = vmatprep.subr.mxu0 0.0
        %295 = vmatpush1.msra.mxu0 0.0
        %296 = vmatprep.subr.mxu0 0.0
        %297 = vmatpush1.msra.mxu0 0.0
        %298 = vmatprep.subr.mxu0 0.0
        %299 = vmatpush1.msra.mxu0 0.0
        %300 = vmatprep.subr.mxu0 0.0
        %301 = vmatpush1.msra.mxu0 0.0
        %302 = vmatprep.subr.mxu0 0.0
        %303 = vmatpush1.msra.mxu0 0.0
        %304 = vmatprep.subr.mxu0 0.0
        %305 = vmatpush1.msra.mxu0 0.0
        %306 = vmatprep.subr.mxu0 0.0
        %307 = vmatpush1.msra.mxu0 0.0
        %308 = vmatprep.mubr.f32.mxu0 0.0
        %309 = vmatmul.mubr.f32.gmra.mrb[0].mxu0 %v239
        %v310 = vpop.f32.mrb[0].mxu0
        %v311 = vadd.f32 %v235, %v310
        %v312 = vpop.f32.mrb[0].mxu0
        %313 = vmatprep.mubr.f32.mxu0 0.0
        %314 = vmatmul.mubr.f32.gmra.mrb[0].mxu0 %v242
        %v315 = vpop.f32.mrb[0].mxu0
        %v316 = vadd.f32 %v235, %v315
        %v317 = vpop.f32.mrb[0].mxu0
        %318 = vdwg.mxu0
        %319 = vst.msk [vmem:[%s221] sm:$0xff] %vm237, %v311
        %320 = vst.msk [vmem:[%s221 + $0x8] sm:$0xff] %vm237, %v316
        %s321 = sand.u32 %s113, 1
        %s322 = scalar_lea.sflag [#allocation4], %s321
        %s323 = sand.u32 %s113, 1
        %s324 = smul.addr %s323, 16
        %s325 = scalar_lea.vmem [#allocation7], %s324
        // Predicated region
        $region41: #{tpu_custom_call.1} parent=31 // pred_check
          %p326 = pneg %p123
        $region42: #{tpu_custom_call.1} parent=31 // pred_check_branch
          %328 = sbr.rel (%p326) target = $region44
        $region43: #{tpu_custom_call.1} parent=31 // pred_region
          %s329 = smul.u32 2, %s26
          %s331 = ssub.s32 256, 256
          %332 = vsyncadd %s322, %s331
          %s333 = smul.addr %s25, 2
          %s334 = sadd.s32 %s329, %s333
          %s335 = smul.addr %s334, 128
          %s336 = scalar_lea.hbm %s3, %s335
          %s337 = sshll.u32 %s325, 4
          %s338 = int_to_ptr.vmem [resolvable:$true] %s337
          %343 = dma.vmem_to_hbm [thread:$0]  %s338, 256, %s336, %s322, 128, 128, 8
        $region44: #{tpu_custom_call.1} parent=31 // pred_fallthru
          _
      $region32: #{tpu_custom_call.1} parent=5 // pred_fallthru
        _
      %p344 = scmp.le.s32.totalorder 2, %s16
      // Predicated region
      $region45: #{tpu_custom_call.1} parent=5 // pred_check
        %p345 = pneg %p344
      $region46: #{tpu_custom_call.1} parent=5 // pred_check_branch
        %347 = sbr.rel (%p345) target = $region48
      $region47: #{tpu_custom_call.1} parent=5 // pred_region
        %s348 = ssub.s32 %s16, 2
        // Predicated region
        $region49: #{tpu_custom_call.1} parent=47 // pred_check
          %p349 = pneg %p129
        $region50: #{tpu_custom_call.1} parent=47 // pred_check_branch
          %351 = sbr.rel (%p349) target = $region52
        $region51: #{tpu_custom_call.1} parent=47 // pred_region
          %s352 = sand.u32 %s114, 1
          %s353 = scalar_lea.sflag [#allocation4], %s352
          %s354 = sand.u32 %s114, 1
          %s355 = smul.addr %s354, 16
          %s356 = scalar_lea.vmem [#allocation7], %s355
          %357 = dma.done %s353, 256
        $region52: #{tpu_custom_call.1} parent=47 // pred_fallthru
          _
      $region48: #{tpu_custom_call.1} parent=5 // pred_fallthru
        _
    $region6: #{tpu_custom_call.1} parent=1 // loop_footer
      %s20 = sadd.s32 1, %s16
    $region7: #{tpu_custom_call.1} parent=1 // loop_footer_branch
      %15 = sbr.rel target = $region3
    $region8: #{tpu_custom_call.1} parent=1 // loop_exit
      _
    %358 = vsyncpa [#allocation3], 1
    %s359 = scalar_lea.sflag [#allocation3], 1
    %360 = vsyncpa %s359, 1
    %361 = vsyncpa [#allocation6], 1
    %362 = vsyncpa [#allocation4], 1
    %s363 = scalar_lea.sflag [#allocation4], 1
    %364 = vsyncpa %s363, 1

// kernel: tpu_custom_call.1
$region0: #{tpu_custom_call.1}
  #allocation0 [shape = 'u32[]', space=smem, size = 0x4, offset = 0x4, fixed_abs, tag = 'smem constant byte address 0x4 - core index']
  #allocation1 [shape = 'u32[144,128]{1,0:T(1,128)}', space=vmem, size = 0x12000, scoped, tag = 'internal scratch']
  %s0 = inlined_call_operand.hbm [shape: f32[2,16,32], index: 0, kind: input, shape index: {}]
  %s1 = inlined_call_operand.hbm [shape: f32[32,32], index: 1, kind: input, shape index: {}]
  %s2 = inlined_call_operand.vmem [shape: f32[1,32], index: 2, kind: input, shape index: {}]
  %s3 = inlined_call_operand.hbm [shape: f32[2,16,32], index: 3, kind: output, shape index: {}]
  %s4 = sld [smem:[#allocation0]]
  $region53: #{tpu_custom_call.1} parent=0
    _
  %s6 = ssub.s32 1, %s4
  %s7 = scalar_select 0, %s6, %s4
  $region1: #{tpu_custom_call.1} parent=0
    #allocation2 [shape = 'u8[16384]{0}', space=vmem, size = 0x4000, scoped, tag = 'input window, operand 0']
    #allocation3 [shape = 's32[2]{0}', space=sflag, size = 0x8, scoped, tag = 'scoped memory for tpu_custom_call.1']
    #allocation4 [shape = 's32[2]{0}', space=sflag, size = 0x8, scoped, tag = 'scoped memory for tpu_custom_call.1']
    #allocation5 [shape = 'u8[16384]{0}', space=vmem, size = 0x4000, scoped, tag = 'input window, operand 1, single buffered']
    #allocation6 [shape = 's32[1]{0}', space=sflag, size = 0x4, scoped, tag = 'scoped memory for tpu_custom_call.1']
    #allocation7 [shape = 'u8[16384]{0}', space=vmem, size = 0x4000, scoped, tag = 'output window, operand 0']
    %8 = vsyncpa [#allocation3], 0
    %s9 = scalar_lea.sflag [#allocation3], 1
    %10 = vsyncpa %s9, 0
    %11 = vsyncpa [#allocation6], 0
    %12 = vsyncpa [#allocation4], 0
    %s13 = scalar_lea.sflag [#allocation4], 1
    %14 = vsyncpa %s13, 0
    loop: start=0, step=1, limit=4
    $region2: #{tpu_custom_call.1} parent=1 // loop_pre_header
      _
    $region3: #{tpu_custom_call.1} parent=1 // loop_header
      %s16 = sphi 0, %s20
      %p17 = scmp.ge.s32.totalorder %s16, 4
      %s23 = sphi 0, %s35
      %s24 = sphi 0, %s31
      %s25 = sphi 0, %s23
      %s26 = sphi 0, %s24
      %s27 = sphi 0, %s25
      %s28 = sphi 0, %s26
      %s40 = sphi 0, %s42
      %s43 = sphi 0, %s40
      %s44 = sphi 0, %s43
      %s60 = sphi 0, %s44
      %s64 = sphi 0, %s64
      %s66 = sphi 0, %s64
      %s67 = sphi 0, %s66
      %s81 = sphi 0, %s67
      %s85 = sphi 0, %s85
      %s87 = sphi 0, %s85
      %s88 = sphi 0, %s87
      %s102 = sphi 0, %s88
      %s110 = sphi 0, %s112
      %s113 = sphi 0, %s110
      %s114 = sphi 0, %s113
      %s130 = sphi 0, %s114
    $region4: #{tpu_custom_call.1} parent=1 // loop_header_branch
      %19 = sbr.rel (%p17) target = $region8
    $region5: #{tpu_custom_call.1} parent=1 // loop_body
      %s21 = ssub.s32 %s16, 1
      %s22 = ssub.s32 %s16, 2
      %s29 = sadd.s32 1, %s24
      %p30 = scmp.ge.s32.totalorder %s29, 1
      %s31 = scalar_select %p30, 0, %s29
      %s32 = sadd.s32 1, %s23
      %s33 = scalar_select %p30, %s32, %s23
      %p34 = scmp.ge.s32.totalorder %s33, 2
      %s35 = scalar_select %p34, 0, %s33
      %s36 = ssub.s32 %s23, %s35
      %s37 = ssub.s32 %s24, %s31
      %s38 = sor.u32 %s36, %s37
      %p39 = scmp.eq.s32.totalorder %s38, 0
      %s41 = sadd.s32 %s40, 1
      %s42 = scalar_select %p39, %s40, %s41
      %p45 = pneg %p39
      %p46 = scmp.eq.s32.totalorder %s16, 1
      %p47 = por %p45, %p46
      %p48 = scmp.ne.s32.totalorder %s40, %s43
      %p49 = scmp.eq.s32.totalorder %s16, 0
      %p50 = por %p48, %p49
      %p51 = scmp.ne.s32.totalorder %s40, %s43
      %p52 = scmp.eq.s32.totalorder %s21, 1
      %p53 = por %p51, %p52
      %p54 = scmp.ne.s32.totalorder %s43, %s44
      %p55 = scmp.eq.s32.totalorder %s21, 0
      %p56 = por %p54, %p55
      %p57 = scmp.ne.s32.totalorder %s43, %s44
      %p58 = scmp.eq.s32.totalorder %s22, 1
      %p59 = por %p57, %p58
      %p61 = scmp.ne.s32.totalorder %s44, %s60
      %p62 = scmp.eq.s32.totalorder %s22, 0
      %p63 = por %p61, %p62
      %s65 = sadd.s32 %s64, 1
      %p68 = scmp.eq.s32.totalorder %s16, 1
      %p69 = scmp.ne.s32.totalorder %s64, %s66
      %p70 = scmp.eq.s32.totalorder %s16, 0
      %p71 = por %p69, %p70
      %p72 = scmp.ne.s32.totalorder %s64, %s66
      %p73 = scmp.eq.s32.totalorder %s21, 1
      %p74 = por %p72, %p73
      %p75 = scmp.ne.s32.totalorder %s66, %s67
      %p76 = scmp.eq.s32.totalorder %s21, 0
      %p77 = por %p75, %p76
      %p78 = scmp.ne.s32.totalorder %s66, %s67
      %p79 = scmp.eq.s32.totalorder %s22, 1
      %p80 = por %p78, %p79
      %p82 = scmp.ne.s32.totalorder %s67, %s81
      %p83 = scmp.eq.s32.totalorder %s22, 0
      %p84 = por %p82, %p83
      %s86 = sadd.s32 %s85, 1
      %p89 = scmp.eq.s32.totalorder %s16, 1
      %p90 = scmp.ne.s32.totalorder %s85, %s87
      %p91 = scmp.eq.s32.totalorder %s16, 0
      %p92 = por %p90, %p91
      %p93 = scmp.ne.s32.totalorder %s85, %s87
      %p94 = scmp.eq.s32.totalorder %s21, 1
      %p95 = por %p93, %p94
      %p96 = scmp.ne.s32.totalorder %s87, %s88
      %p97 = scmp.eq.s32.totalorder %s21, 0
      %p98 = por %p96, %p97
      %p99 = scmp.ne.s32.totalorder %s87, %s88
      %p100 = scmp.eq.s32.totalorder %s22, 1
      %p101 = por %p99, %p100
      %p103 = scmp.ne.s32.totalorder %s88, %s102
      %p104 = scmp.eq.s32.totalorder %s22, 0
      %p105 = por %p103, %p104
      %s106 = ssub.s32 %s23, %s35
      %s107 = ssub.s32 %s24, %s31
      %s108 = sor.u32 %s106, %s107
      %p109 = scmp.eq.s32.totalorder %s108, 0
      %s111 = sadd.s32 %s110, 1
      %s112 = scalar_select %p109, %s110, %s111
      %p115 = pneg %p109
      %p116 = scmp.eq.s32.totalorder %s16, 1
      %p117 = por %p115, %p116
      %p118 = scmp.ne.s32.totalorder %s110, %s113
      %p119 = scmp.eq.s32.totalorder %s16, 0
      %p120 = por %p118, %p119
      %p121 = scmp.ne.s32.totalorder %s110, %s113
      %p122 = scmp.eq.s32.totalorder %s21, 1
      %p123 = por %p121, %p122
      %p124 = scmp.ne.s32.totalorder %s113, %s114
      %p125 = scmp.eq.s32.totalorder %s21, 0
      %p126 = por %p124, %p125
      %p127 = scmp.ne.s32.totalorder %s113, %s114
      %p128 = scmp.eq.s32.totalorder %s22, 1
      %p129 = por %p127, %p128
      %p131 = scmp.ne.s32.totalorder %s114, %s130
      %p132 = scmp.eq.s32.totalorder %s22, 0
      %p133 = por %p131, %p132
      %p134 = scmp.le.s32.totalorder 1, %s16
      %p135 = scmp.lt.s32.totalorder %s16, 3
      %p136 = pnand %p134, %p135
      %p137 = pneg %p136
      // Predicated region
      $region9: #{tpu_custom_call.1} parent=5 // pred_check
        _
      $region10: #{tpu_custom_call.1} parent=5 // pred_check_branch
        %139 = sbr.rel (%p136) target = $region12
      $region11: #{tpu_custom_call.1} parent=5 // pred_region
        %s140 = ssub.s32 %s16, 1
        // Predicated region
        $region13: #{tpu_custom_call.1} parent=11 // pred_check
          %p141 = pneg %p77
        $region14: #{tpu_custom_call.1} parent=11 // pred_check_branch
          %143 = sbr.rel (%p141) target = $region16
        $region15: #{tpu_custom_call.1} parent=11 // pred_region
          %s145 = ssub.s32 512, 512
          %146 = vsyncadd [#allocation6], %s145
          %s147 = sshll.u32 [#allocation5], 4
          %s148 = int_to_ptr.vmem [resolvable:$true] %s147
          %153 = dma.hbm_to_vmem [thread:$0]  %s1, 512, %s148, [#allocation6], 128, 128, 8
        $region16: #{tpu_custom_call.1} parent=11 // pred_fallthru
          _
        // Predicated region
        $region17: #{tpu_custom_call.1} parent=11 // pred_check
          %p154 = pneg %p98
        $region18: #{tpu_custom_call.1} parent=11 // pred_check_branch
          %156 = sbr.rel (%p154) target = $region20
        $region19: #{tpu_custom_call.1} parent=11 // pred_region
          _
        $region20: #{tpu_custom_call.1} parent=11 // pred_fallthru
          _
      $region12: #{tpu_custom_call.1} parent=5 // pred_fallthru
        _
      %p157 = scmp.lt.s32.totalorder %s16, 2
      // Predicated region
      $region21: #{tpu_custom_call.1} parent=5 // pred_check
        %p158 = pneg %p157
      $region22: #{tpu_custom_call.1} parent=5 // pred_check_branch
        %160 = sbr.rel (%p158) target = $region24
      $region23: #{tpu_custom_call.1} parent=5 // pred_region
        // Predicated region
        $region25: #{tpu_custom_call.1} parent=23 // pred_check
          %p161 = pneg %p50
        $region26: #{tpu_custom_call.1} parent=23 // pred_check_branch
          %163 = sbr.rel (%p161) target = $region28
        $region27: #{tpu_custom_call.1} parent=23 // pred_region
          %s164 = sand.u32 %s40, 1
          %s165 = scalar_lea.sflag [#allocation3], %s164
          %s166 = sand.u32 %s40, 1
          %s167 = smul.addr %s166, 16
          %s168 = scalar_lea.vmem [#allocation2], %s167
          %s169 = smul.u32 2, %s24
          %s171 = ssub.s32 256, 256
          %172 = vsyncadd %s165, %s171
          %s173 = smul.addr %s23, 2
          %s174 = sadd.s32 %s169, %s173
          %s175 = smul.addr %s174, 128
          %s176 = scalar_lea.hbm %s0, %s175
          %s177 = sshll.u32 %s168, 4
          %s178 = int_to_ptr.vmem [resolvable:$true] %s177
          %183 = dma.hbm_to_vmem [thread:$0]  %s176, 256, %s178, %s165, 128, 128, 8
        $region28: #{tpu_custom_call.1} parent=23 // pred_fallthru
          _
      $region24: #{tpu_custom_call.1} parent=5 // pred_fallthru
        _
      %p184 = scmp.le.s32.totalorder 1, %s16
      %p185 = scmp.lt.s32.totalorder %s16, 3
      %p186 = pnand %p184, %p185
      %p187 = pneg %p186
      // Predicated region
      $region29: #{tpu_custom_call.1} parent=5 // pred_check
        _
      $region30: #{tpu_custom_call.1} parent=5 // pred_check_branch
        %189 = sbr.rel (%p186) target = $region32
      $region31: #{tpu_custom_call.1} parent=5 // pred_region
        %s190 = ssub.s32 %s16, 1
        %s191 = sand.u32 %s43, 1
        %s192 = scalar_lea.sflag [#allocation3], %s191
        %s193 = sand.u32 %s43, 1
        %s194 = smul.addr %s193, 16
        %s195 = scalar_lea.vmem [#allocation2], %s194
        // Predicated region
        $region33: #{tpu_custom_call.1} parent=31 // pred_check
          %p196 = pneg %p56
        $region34: #{tpu_custom_call.1} parent=31 // pred_check_branch
          %198 = sbr.rel (%p196) target = $region36
        $region35: #{tpu_custom_call.1} parent=31 // pred_region
          %199 = dma.done %s192, 256
        $region36: #{tpu_custom_call.1} parent=31 // pred_fallthru
          _
        // Predicated region
        $region37: #{tpu_custom_call.1} parent=31 // pred_check
          %p200 = pneg %p77
        $region38: #{tpu_custom_call.1} parent=31 // pred_check_branch
          %202 = sbr.rel (%p200) target = $region40
        $region39: #{tpu_custom_call.1} parent=31 // pred_region
          %203 = dma.done [#allocation6], 512
        $region40: #{tpu_custom_call.1} parent=31 // pred_fallthru
          _
        %s204 = sand.u32 %s43, 1
        %s205 = scalar_lea.sflag [#allocation3], %s204
        %s206 = sand.u32 %s43, 1
        %s207 = smul.addr %s206, 16
        %s208 = scalar_lea.vmem [#allocation2], %s207
        %p209 = pneg %p56
        %p210 = pneg %p53
        %p211 = pneg %p77
        %p212 = pneg %p74
        %p213 = pneg %p98
        %p214 = pneg %p95
        %p215 = pneg %p126
        %p216 = pneg %p123
        %s217 = sand.u32 %s113, 1
        %s218 = scalar_lea.sflag [#allocation4], %s217
        %s219 = sand.u32 %s113, 1
        %s220 = smul.addr %s219, 16
        %s221 = scalar_lea.vmem [#allocation7], %s220
        %s222 = smul.u32 2, %s26
        %s223 = smul.u32 2, %s26
        %v224 = vld [vmem:[%s195] sm:$0xff]
        %v225 = vld [vmem:[%s195 + $0x8] sm:$0xff]
        %v226 = vld [vmem:[#allocation5] sm:$0xff]
        %v227 = vld [vmem:[#allocation5 + $0x8] sm:$0xff]
        %v228 = vld [vmem:[#allocation5 + $0x10] sm:$0xff]
        %v229 = vld [vmem:[#allocation5 + $0x18] sm:$0xff]
        %v230 = vld [vmem:[%s2] sm:$0x1]
        %v232 = vlaneseq
        %v233 = vshrl.u32 %v232, 7
        %v234 = vsub.s32 0, %v233
        %v235 = vrot.slane %v230, %v234
        %vm237 = vcmask 261120
        %v239 = vsel %vm237, %v224, 0
        %v242 = vsel %vm237, %v225, 0
        %244 = vmatprep.subr.mxu0 0.0
        %245 = vmatpush1.msra.mxu0 %v226
        %246 = vmatprep.subr.mxu0 0.0
        %247 = vmatpush1.msra.mxu0 %v227
        %248 = vmatprep.subr.mxu0 0.0
        %249 = vmatpush1.msra.mxu0 %v228
        %250 = vmatprep.subr.mxu0 0.0
        %251 = vmatpush1.msra.mxu0 %v229
        %252 = vmatprep.subr.mxu0 0.0
        %253 = vmatpush1.msra.mxu0 0.0
        %254 = vmatprep.subr.mxu0 0.0
        %255 = vmatpush1.msra.mxu0 0.0
        %256 = vmatprep.subr.mxu0 0.0
        %257 = vmatpush1.msra.mxu0 0.0
        %258 = vmatprep.subr.mxu0 0.0
        %259 = vmatpush1.msra.mxu0 0.0
        %260 = vmatprep.subr.mxu0 0.0
        %261 = vmatpush1.msra.mxu0 0.0
        %262 = vmatprep.subr.mxu0 0.0
        %263 = vmatpush1.msra.mxu0 0.0
        %264 = vmatprep.subr.mxu0 0.0
        %265 = vmatpush1.msra.mxu0 0.0
        %266 = vmatprep.subr.mxu0 0.0
        %267 = vmatpush1.msra.mxu0 0.0
        %268 = vmatprep.subr.mxu0 0.0
        %269 = vmatpush1.msra.mxu0 0.0
        %270 = vmatprep.subr.mxu0 0.0
        %271 = vmatpush1.msra.mxu0 0.0
        %272 = vmatprep.subr.mxu0 0.0
        %273 = vmatpush1.msra.mxu0 0.0
        %274 = vmatprep.subr.mxu0 0.0
        %275 = vmatpush1.msra.mxu0 0.0
        %276 = vmatprep.subr.mxu0 0.0
        %277 = vmatpush1.msra.mxu0 0.0
        %278 = vmatprep.subr.mxu0 0.0
        %279 = vmatpush1.msra.mxu0 0.0
        %280 = vmatprep.subr.mxu0 0.0
        %281 = vmatpush1.msra.mxu0 0.0
        %282 = vmatprep.subr.mxu0 0.0
        %283 = vmatpush1.msra.mxu0 0.0
        %284 = vmatprep.subr.mxu0 0.0
        %285 = vmatpush1.msra.mxu0 0.0
        %286 = vmatprep.subr.mxu0 0.0
        %287 = vmatpush1.msra.mxu0 0.0
        %288 = vmatprep.subr.mxu0 0.0
        %289 = vmatpush1.msra.mxu0 0.0
        %290 = vmatprep.subr.mxu0 0.0
        %291 = vmatpush1.msra.mxu0 0.0
        %292 = vmatprep.subr.mxu0 0.0
        %293 = vmatpush1.msra.mxu0 0.0
        %294 = vmatprep.subr.mxu0 0.0
        %295 = vmatpush1.msra.mxu0 0.0
        %296 = vmatprep.subr.mxu0 0.0
        %297 = vmatpush1.msra.mxu0 0.0
        %298 = vmatprep.subr.mxu0 0.0
        %299 = vmatpush1.msra.mxu0 0.0
        %300 = vmatprep.subr.mxu0 0.0
        %301 = vmatpush1.msra.mxu0 0.0
        %302 = vmatprep.subr.mxu0 0.0
        %303 = vmatpush1.msra.mxu0 0.0
        %304 = vmatprep.subr.mxu0 0.0
        %305 = vmatpush1.msra.mxu0 0.0
        %306 = vmatprep.subr.mxu0 0.0
        %307 = vmatpush1.msra.mxu0 0.0
        %308 = vmatprep.mubr.f32.mxu0 0.0
        %309 = vmatmul.mubr.f32.gmra.mrb[0].mxu0 %v239
        %v310 = vpop.f32.mrb[0].mxu0
        %v311 = vadd.f32 %v235, %v310
        %v312 = vpop.f32.mrb[0].mxu0
        %313 = vmatprep.mubr.f32.mxu0 0.0
        %314 = vmatmul.mubr.f32.gmra.mrb[0].mxu0 %v242
        %v315 = vpop.f32.mrb[0].mxu0
        %v316 = vadd.f32 %v235, %v315
        %v317 = vpop.f32.mrb[0].mxu0
        %318 = vdwg.mxu0
        %319 = vst.msk [vmem:[%s221] sm:$0xff] %vm237, %v311
        %320 = vst.msk [vmem:[%s221 + $0x8] sm:$0xff] %vm237, %v316
        %s321 = sand.u32 %s113, 1
        %s322 = scalar_lea.sflag [#allocation4], %s321
        %s323 = sand.u32 %s113, 1
        %s324 = smul.addr %s323, 16
        %s325 = scalar_lea.vmem [#allocation7], %s324
        // Predicated region
        $region41: #{tpu_custom_call.1} parent=31 // pred_check
          %p326 = pneg %p123
        $region42: #{tpu_custom_call.1} parent=31 // pred_check_branch
          %328 = sbr.rel (%p326) target = $region44
        $region43: #{tpu_custom_call.1} parent=31 // pred_region
          %s329 = smul.u32 2, %s26
          %s331 = ssub.s32 256, 256
          %332 = vsyncadd %s322, %s331
          %s333 = smul.addr %s25, 2
          %s334 = sadd.s32 %s329, %s333
          %s335 = smul.addr %s334, 128
          %s336 = scalar_lea.hbm %s3, %s335
          %s337 = sshll.u32 %s325, 4
          %s338 = int_to_ptr.vmem [resolvable:$true] %s337
          %343 = dma.vmem_to_hbm [thread:$0]  %s338, 256, %s336, %s322, 128, 128, 8
        $region44: #{tpu_custom_call.1} parent=31 // pred_fallthru
          _
      $region32: #{tpu_custom_call.1} parent=5 // pred_fallthru
        _
      %p344 = scmp.le.s32.totalorder 2, %s16
      // Predicated region
      $region45: #{tpu_custom_call.1} parent=5 // pred_check
        %p345 = pneg %p344
      $region46: #{tpu_custom_call.1} parent=5 // pred_check_branch
        %347 = sbr.rel (%p345) target = $region48
      $region47: #{tpu_custom_call.1} parent=5 // pred_region
        %s348 = ssub.s32 %s16, 2
        // Predicated region
        $region49: #{tpu_custom_call.1} parent=47 // pred_check
          %p349 = pneg %p129
        $region50: #{tpu_custom_call.1} parent=47 // pred_check_branch
          %351 = sbr.rel (%p349) target = $region52
        $region51: #{tpu_custom_call.1} parent=47 // pred_region
          %s352 = sand.u32 %s114, 1
          %s353 = scalar_lea.sflag [#allocation4], %s352
          %s354 = sand.u32 %s114, 1
          %s355 = smul.addr %s354, 16
          %s356 = scalar_lea.vmem [#allocation7], %s355
          %357 = dma.done %s353, 256
        $region52: #{tpu_custom_call.1} parent=47 // pred_fallthru
          _
      $region48: #{tpu_custom_call.1} parent=5 // pred_fallthru
        _
    $region6: #{tpu_custom_call.1} parent=1 // loop_footer
      %s20 = sadd.s32 1, %s16
    $region7: #{tpu_custom_call.1} parent=1 // loop_footer_branch
      %15 = sbr.rel target = $region3
    $region8: #{tpu_custom_call.1} parent=1 // loop_exit
      _
    %358 = vsyncpa [#allocation3], 1
    %s359 = scalar_lea.sflag [#allocation3], 1
    %360 = vsyncpa %s359, 1
    %361 = vsyncpa [#allocation6], 1
    %362 = vsyncpa [#allocation4], 1
    %s363 = scalar_lea.sflag [#allocation4], 1
    %364 = vsyncpa %s363, 1

</llo_original>
